<compile_context>
chip_gen: v7x
topology: tpu7x:2x2x1
jax: 0.10.0
libtpu: 0.0.40
codegen_flags: <defaults>
</compile_context>

<pallas_src>
import functools

import jax
import jax.numpy as jnp
from jax import lax
from jax.experimental import pallas as pl
from jax.experimental.pallas import tpu as pltpu


def _gcn2_kernel(a_ref, x_ref, w1_ref, w2_ref, out_ref, *, num_graphs, num_nodes):
    B, N = num_graphs, num_nodes
    BN = B * N

    A = a_ref[...]                                   # (B*N, N)  per-graph rows stacked
    X = x_ref[...]                                   # (B*N, F_in)
    W1 = w1_ref[...]                                 # (F_in, H)
    W2 = w2_ref[...]                                 # (H, F_out)
    f_in, hidden = W1.shape
    f_out = W2.shape[1]

    # Degree of (A + I) computed straight from A — no identity matrix materialized.
    deg = jnp.sum(A, axis=1, keepdims=True) + jnp.float32(1.0)     # (B*N, 1), >= 1
    d_is = lax.rsqrt(deg)                                          # D^-1/2
    inv_deg = d_is * d_is                                          # D^-1

    # Row-scaled adjacency; the column scaling of D^-1/2 A D^-1/2 is folded into
    # the (narrow) feature matrices inside propagate().
    A_half = A * d_is                                              # (B*N, N)

    # Block-diagonal (B*N, B*N) adjacency so propagation is ONE MXU matmul per
    # layer for the whole batch. Column-block g keeps only the rows belonging to
    # graph g (compare + select); the B column blocks are concatenated along lanes.
    row_pos = lax.broadcasted_iota(jnp.int32, (BN, N), 0)
    blocks = []
    for g in range(B):
        in_g = (row_pos >= g * N) & (row_pos < (g + 1) * N)
        blocks.append(jnp.where(in_g, A_half, jnp.float32(0.0)))
    A_bd = jnp.concatenate(blocks, axis=1)                         # (B*N, B*N)

    def propagate(Z):
        # A_norm @ Z per graph with +I folded algebraically:
        #   (D^-1/2 (A+I) D^-1/2) @ Z = (D^-1/2 A) @ (D^-1/2 Z) + D^-1 Z
        return (jnp.dot(A_bd, d_is * Z, preferred_element_type=jnp.float32)
                + inv_deg * Z)

    # ---- Layer 1: relu(A_norm @ X @ W1) ------------------------------------
    # Propagate the narrower matrix through the (B*N, B*N) matmul.
    if f_in <= hidden:
        h1 = jnp.dot(propagate(X), W1, preferred_element_type=jnp.float32)
    else:
        h1 = propagate(jnp.dot(X, W1, preferred_element_type=jnp.float32))
    h1 = jnp.maximum(h1, jnp.float32(0.0))                         # (B*N, H)

    # ---- Layer 2: softmax(A_norm @ H1 @ W2, axis=feature) ------------------
    if f_out <= hidden:
        logits = propagate(jnp.dot(h1, W2, preferred_element_type=jnp.float32))
    else:
        logits = jnp.dot(propagate(h1), W2, preferred_element_type=jnp.float32)

    # Row softmax over the feature dim (dim=1 in the PyTorch module).
    m = jnp.max(logits, axis=1, keepdims=True)
    e = jnp.exp(logits - m)
    s = jnp.sum(e, axis=1, keepdims=True)                          # >= 1, safe
    out_ref[...] = e / s


def gcn_2layer_batched(A, X, W1, W2):
    """Batched forward: A (B,N,N), X (B,N,F_in) -> (B,N,F_out)."""
    B, N, _ = A.shape
    f_in = X.shape[-1]
    f_out = W2.shape[1]

    # Contiguous flatten outside the kernel (free); kernel sees 2D operands only.
    A_flat = A.reshape(B * N, N).astype(jnp.float32)
    X_flat = X.reshape(B * N, f_in).astype(jnp.float32)

    def vmem():
        return pl.BlockSpec(memory_space=pltpu.MemorySpace.VMEM)

    out_flat = pl.pallas_call(
        functools.partial(_gcn2_kernel, num_graphs=B, num_nodes=N),
        out_shape=jax.ShapeDtypeStruct((B * N, f_out), jnp.float32),
        in_specs=[vmem(), vmem(), vmem(), vmem()],
        out_specs=vmem(),
    )(A_flat, X_flat, W1.astype(jnp.float32), W2.astype(jnp.float32))
    return out_flat.reshape(B, N, f_out)


def gcn_2layer(A, X, W1, W2):
    """Single-graph forward matching GCN_2layer.forward(A, X)."""
    return gcn_2layer_batched(A[None], X[None], W1, W2)[0]


def xavier_uniform(key, fan_in, fan_out, dtype=jnp.float32):
    bound = jnp.sqrt(6.0 / (fan_in + fan_out)).astype(dtype)
    return jax.random.uniform(key, (fan_in, fan_out), dtype, -bound, bound)


def reference(A, X, W1, W2):
    """Plain-JAX reference mirroring the PyTorch forward (single graph)."""
    N = A.shape[0]
    A_ = A + jnp.eye(N, dtype=A.dtype)
    d_inv_sqrt = 1.0 / jnp.sqrt(A_.sum(1))
    A_norm = A_ * d_inv_sqrt[:, None] * d_inv_sqrt[None, :]
    h1 = jnp.maximum(A_norm @ X @ W1, 0.0)
    logits = A_norm @ h1 @ W2
    return jax.nn.softmax(logits, axis=1)


if __name__ == "__main__":
    key = jax.random.PRNGKey(0)
    k_a, k_x, k_w1, k_w2 = jax.random.split(key, 4)

    B, N, in_features, hidden_features, out_features = 4, 8, 16, 32, 8

    # Symmetric 0/1 adjacencies with no self loops (the module adds I itself).
    a_rand = jax.random.uniform(k_a, (B, N, N), jnp.float32)
    A = (a_rand > 0.5).astype(jnp.float32)
    A = jnp.maximum(A, jnp.swapaxes(A, -1, -2))
    A = A * (1.0 - jnp.eye(N, dtype=jnp.float32))

    X = jax.random.normal(k_x, (B, N, in_features), jnp.float32)
    W1 = xavier_uniform(k_w1, in_features, hidden_features)
    W2 = xavier_uniform(k_w2, hidden_features, out_features)

    # Batched path: whole batch in a single kernel invocation.
    out_b = jax.block_until_ready(gcn_2layer_batched(A, X, W1, W2))
    ref_b = jax.vmap(lambda a, x: reference(a, x, W1, W2))(A, X)
    assert out_b.shape == (B, N, out_features)
    assert jnp.allclose(out_b, ref_b, atol=1e-5, rtol=1e-5), "batched mismatch"
    assert jnp.allclose(out_b.sum(axis=-1), 1.0, atol=1e-5), "softmax rows must sum to 1"

    # Single-graph path (matches the PyTorch module's forward signature).
    out1 = jax.block_until_ready(gcn_2layer(A[0], X[0], W1, W2))
    ref1 = reference(A[0], X[0], W1, W2)
    assert out1.shape == (N, out_features)
    assert jnp.allclose(out1, ref1, atol=1e-5, rtol=1e-5), "single-graph mismatch"

    print("KERNEL_OK")
</pallas_src>

<mosaic_0001>
module attributes {stable_mosaic.version = 11 : i64} {
  func.func @_gcn2_kernel(%arg0: memref<32x8xf32, #tpu.memory_space<vmem>>, %arg1: memref<32x16xf32, #tpu.memory_space<vmem>>, %arg2: memref<16x32xf32, #tpu.memory_space<vmem>>, %arg3: memref<32x8xf32, #tpu.memory_space<vmem>>, %arg4: memref<32x8xf32, #tpu.memory_space<vmem>>) attributes {dimension_semantics = [], scalar_prefetch = 0 : i64, scratch_operands = 0 : i64, tpu.core_type = #tpu.core_type<tc>} {
    %c0 = arith.constant 0 : index
    %c0_0 = arith.constant 0 : index
    %0 = vector.load %arg0[%c0, %c0_0] : memref<32x8xf32, #tpu.memory_space<vmem>>, vector<32x8xf32>
    %c0_1 = arith.constant 0 : index
    %c0_2 = arith.constant 0 : index
    %1 = vector.load %arg1[%c0_1, %c0_2] : memref<32x16xf32, #tpu.memory_space<vmem>>, vector<32x16xf32>
    %c0_3 = arith.constant 0 : index
    %c0_4 = arith.constant 0 : index
    %2 = vector.load %arg2[%c0_3, %c0_4] : memref<16x32xf32, #tpu.memory_space<vmem>>, vector<16x32xf32>
    %c0_5 = arith.constant 0 : index
    %c0_6 = arith.constant 0 : index
    %3 = vector.load %arg3[%c0_5, %c0_6] : memref<32x8xf32, #tpu.memory_space<vmem>>, vector<32x8xf32>
    %cst = arith.constant dense<0.000000e+00> : vector<32xf32>
    %4 = vector.multi_reduction <add>, %0, %cst [1] : vector<32x8xf32> to vector<32xf32>
    %5 = vector.shape_cast %4 : vector<32xf32> to vector<32x1xf32>
    %cst_7 = arith.constant 1.000000e+00 : f32
    %6 = vector.broadcast %cst_7 : f32 to vector<32x1xf32>
    %7 = arith.addf %5, %6 : vector<32x1xf32>
    %8 = math.rsqrt %7 : vector<32x1xf32>
    %9 = arith.mulf %8, %8 : vector<32x1xf32>
    %10 = vector.broadcast %8 : vector<32x1xf32> to vector<32x8xf32>
    %11 = arith.mulf %0, %10 : vector<32x8xf32>
    %12 = tpu.iota {dimensions = array<i32: 0>} : vector<32x8xi32>
    %c0_i32 = arith.constant 0 : i32
    %13 = vector.broadcast %c0_i32 : i32 to vector<32x8xi32>
    %14 = arith.cmpi sge, %12, %13 : vector<32x8xi32>
    %c8_i32 = arith.constant 8 : i32
    %15 = vector.broadcast %c8_i32 : i32 to vector<32x8xi32>
    %16 = arith.cmpi slt, %12, %15 : vector<32x8xi32>
    %17 = arith.andi %14, %16 : vector<32x8xi1>
    %cst_8 = arith.constant 0.000000e+00 : f32
    %18 = vector.broadcast %cst_8 : f32 to vector<32x8xf32>
    %19 = arith.select %17, %11, %18 : vector<32x8xi1>, vector<32x8xf32>
    %c8_i32_9 = arith.constant 8 : i32
    %20 = vector.broadcast %c8_i32_9 : i32 to vector<32x8xi32>
    %21 = arith.cmpi sge, %12, %20 : vector<32x8xi32>
    %c16_i32 = arith.constant 16 : i32
    %22 = vector.broadcast %c16_i32 : i32 to vector<32x8xi32>
    %23 = arith.cmpi slt, %12, %22 : vector<32x8xi32>
    %24 = arith.andi %21, %23 : vector<32x8xi1>
    %cst_10 = arith.constant 0.000000e+00 : f32
    %25 = vector.broadcast %cst_10 : f32 to vector<32x8xf32>
    %26 = arith.select %24, %11, %25 : vector<32x8xi1>, vector<32x8xf32>
    %c16_i32_11 = arith.constant 16 : i32
    %27 = vector.broadcast %c16_i32_11 : i32 to vector<32x8xi32>
    %28 = arith.cmpi sge, %12, %27 : vector<32x8xi32>
    %c24_i32 = arith.constant 24 : i32
    %29 = vector.broadcast %c24_i32 : i32 to vector<32x8xi32>
    %30 = arith.cmpi slt, %12, %29 : vector<32x8xi32>
    %31 = arith.andi %28, %30 : vector<32x8xi1>
    %cst_12 = arith.constant 0.000000e+00 : f32
    %32 = vector.broadcast %cst_12 : f32 to vector<32x8xf32>
    %33 = arith.select %31, %11, %32 : vector<32x8xi1>, vector<32x8xf32>
    %c24_i32_13 = arith.constant 24 : i32
    %34 = vector.broadcast %c24_i32_13 : i32 to vector<32x8xi32>
    %35 = arith.cmpi sge, %12, %34 : vector<32x8xi32>
    %c32_i32 = arith.constant 32 : i32
    %36 = vector.broadcast %c32_i32 : i32 to vector<32x8xi32>
    %37 = arith.cmpi slt, %12, %36 : vector<32x8xi32>
    %38 = arith.andi %35, %37 : vector<32x8xi1>
    %cst_14 = arith.constant 0.000000e+00 : f32
    %39 = vector.broadcast %cst_14 : f32 to vector<32x8xf32>
    %40 = arith.select %38, %11, %39 : vector<32x8xi1>, vector<32x8xf32>
    %41 = tpu.concatenate %19, %26, %33, %40 in 1 : vector<32x8xf32>, vector<32x8xf32>, vector<32x8xf32>, vector<32x8xf32> -> vector<32x32xf32>
    %42 = vector.broadcast %8 : vector<32x1xf32> to vector<32x16xf32>
    %43 = arith.mulf %42, %1 : vector<32x16xf32>
    %cst_15 = arith.constant dense<0.000000e+00> : vector<32x16xf32>
    %44 = tpu.matmul %41, %43, %cst_15 {dimension_numbers = #tpu.dot_dimension_numbers<[1], [0], [0], [1], [0, 0, 1, 1], [], []>} : vector<32x32xf32>, vector<32x16xf32>, vector<32x16xf32> -> vector<32x16xf32>
    %45 = vector.broadcast %9 : vector<32x1xf32> to vector<32x16xf32>
    %46 = arith.mulf %45, %1 : vector<32x16xf32>
    %47 = arith.addf %44, %46 : vector<32x16xf32>
    %cst_16 = arith.constant dense<0.000000e+00> : vector<32x32xf32>
    %48 = tpu.matmul %47, %2, %cst_16 {dimension_numbers = #tpu.dot_dimension_numbers<[1], [0], [0], [1], [0, 0, 1, 1], [], []>} : vector<32x16xf32>, vector<16x32xf32>, vector<32x32xf32> -> vector<32x32xf32>
    %cst_17 = arith.constant 0.000000e+00 : f32
    %49 = vector.broadcast %cst_17 : f32 to vector<32x32xf32>
    %50 = arith.maximumf %48, %49 : vector<32x32xf32>
    %cst_18 = arith.constant dense<0.000000e+00> : vector<32x8xf32>
    %51 = tpu.matmul %50, %3, %cst_18 {dimension_numbers = #tpu.dot_dimension_numbers<[1], [0], [0], [1], [0, 0, 1, 1], [], []>} : vector<32x32xf32>, vector<32x8xf32>, vector<32x8xf32> -> vector<32x8xf32>
    %52 = vector.broadcast %8 : vector<32x1xf32> to vector<32x8xf32>
    %53 = arith.mulf %52, %51 : vector<32x8xf32>
    %cst_19 = arith.constant dense<0.000000e+00> : vector<32x8xf32>
    %54 = tpu.matmul %41, %53, %cst_19 {dimension_numbers = #tpu.dot_dimension_numbers<[1], [0], [0], [1], [0, 0, 1, 1], [], []>} : vector<32x32xf32>, vector<32x8xf32>, vector<32x8xf32> -> vector<32x8xf32>
    %55 = vector.broadcast %9 : vector<32x1xf32> to vector<32x8xf32>
    %56 = arith.mulf %55, %51 : vector<32x8xf32>
    %57 = arith.addf %54, %56 : vector<32x8xf32>
    %cst_20 = arith.constant dense<0xFF800000> : vector<32xf32>
    %58 = vector.multi_reduction <maximumf>, %57, %cst_20 [1] : vector<32x8xf32> to vector<32xf32>
    %59 = vector.shape_cast %58 : vector<32xf32> to vector<32x1xf32>
    %60 = vector.broadcast %59 : vector<32x1xf32> to vector<32x8xf32>
    %61 = arith.subf %57, %60 : vector<32x8xf32>
    %62 = math.exp %61 : vector<32x8xf32>
    %cst_21 = arith.constant dense<0.000000e+00> : vector<32xf32>
    %63 = vector.multi_reduction <add>, %62, %cst_21 [1] : vector<32x8xf32> to vector<32xf32>
    %64 = vector.shape_cast %63 : vector<32xf32> to vector<32x1xf32>
    %65 = vector.broadcast %64 : vector<32x1xf32> to vector<32x8xf32>
    %66 = arith.divf %62, %65 : vector<32x8xf32>
    %c0_22 = arith.constant 0 : index
    %c0_23 = arith.constant 0 : index
    %67 = vector.load %arg4[%c0_22, %c0_23] : memref<32x8xf32, #tpu.memory_space<vmem>>, vector<32x8xf32>
    tpu.vector_store %arg4[%c0_22, %c0_23], %66 {strides = array<i32>} : memref<32x8xf32, #tpu.memory_space<vmem>>, vector<32x8xf32>,
    return
  }
}

</mosaic_0001>

<llo_original>
// kernel: tpu_custom_call.1
$region0: #{tpu_custom_call.1}
  #allocation0 [shape = 'u32[]', space=smem, size = 0x4, offset = 0x4, fixed_abs, tag = 'smem constant byte address 0x4 - core index']
  #allocation1 [shape = 'u32[144,128]{1,0:T(1,128)}', space=vmem, size = 0x12000, scoped, tag = 'internal scratch']
  %s0 = inlined_call_operand.vmem [shape: f32[32,8], index: 0, kind: input, shape index: {}]
  %s1 = inlined_call_operand.vmem [shape: f32[32,16], index: 1, kind: input, shape index: {}]
  %s2 = inlined_call_operand.vmem [shape: f32[16,32], index: 2, kind: input, shape index: {}]
  %s3 = inlined_call_operand.vmem [shape: f32[32,8], index: 3, kind: input, shape index: {}]
  %s4 = inlined_call_operand.vmem [shape: f32[32,8], index: 4, kind: output, shape index: {}]
  %s5 = sld [smem:[#allocation0]]
  $region26: #{tpu_custom_call.1} parent=0
    _
  %s7 = ssub.s32 1, %s5
  %s8 = scalar_select 0, %s7, %s5
  // Predicated region
  $region2: #{tpu_custom_call.1} parent=0 // pred_check
    _
  $region3: #{tpu_custom_call.1} parent=0 // pred_check_branch
    %10 = sbr.rel (0) target = $region5
  $region4: #{tpu_custom_call.1} parent=0 // pred_region
    _
  $region5: #{tpu_custom_call.1} parent=0 // pred_fallthru
    _
  // Predicated region
  $region6: #{tpu_custom_call.1} parent=0 // pred_check
    _
  $region7: #{tpu_custom_call.1} parent=0 // pred_check_branch
    %12 = sbr.rel (0) target = $region9
  $region8: #{tpu_custom_call.1} parent=0 // pred_region
    _
  $region9: #{tpu_custom_call.1} parent=0 // pred_fallthru
    _
  // Predicated region
  $region10: #{tpu_custom_call.1} parent=0 // pred_check
    _
  $region11: #{tpu_custom_call.1} parent=0 // pred_check_branch
    %14 = sbr.rel (0) target = $region13
  $region12: #{tpu_custom_call.1} parent=0 // pred_region
    _
  $region13: #{tpu_custom_call.1} parent=0 // pred_fallthru
    _
  // Predicated region
  $region14: #{tpu_custom_call.1} parent=0 // pred_check
    _
  $region15: #{tpu_custom_call.1} parent=0 // pred_check_branch
    %16 = sbr.rel (0) target = $region17
  $region16: #{tpu_custom_call.1} parent=0 // pred_region
    _
  $region17: #{tpu_custom_call.1} parent=0 // pred_fallthru
    _
  %v17 = vld [vmem:[%s0] sm:$0xff]
  %v18 = vld [vmem:[%s0 + $0x8] sm:$0xff]
  %v19 = vld [vmem:[%s0 + $0x10] sm:$0xff]
  %v20 = vld [vmem:[%s0 + $0x18] sm:$0xff]
  %v21 = vld [vmem:[%s1] sm:$0xff]
  %v22 = vld [vmem:[%s1 + $0x8] sm:$0xff]
  %v23 = vld [vmem:[%s1 + $0x10] sm:$0xff]
  %v24 = vld [vmem:[%s1 + $0x18] sm:$0xff]
  %v25 = vld [vmem:[%s2] sm:$0xff]
  %v26 = vld [vmem:[%s2 + $0x8] sm:$0xff]
  %v27 = vld [vmem:[%s3] sm:$0xff]
  %v28 = vld [vmem:[%s3 + $0x8] sm:$0xff]
  %v29 = vld [vmem:[%s3 + $0x10] sm:$0xff]
  %v30 = vld [vmem:[%s3 + $0x18] sm:$0xff]
  %vm31 = vcmask 64512
  %v32 = vsel %vm31, %v17, 0.0
  %33 = vadd.xlane.f32.xlu0 %v32
  %v34 = vpop.xlane.xlu0 %33
  %v35 = vsel %vm31, %v18, 0.0
  %36 = vadd.xlane.f32.xlu0 %v35
  %v37 = vpop.xlane.xlu0 %36
  %v38 = vsel %vm31, %v19, 0.0
  %39 = vadd.xlane.f32.xlu0 %v38
  %v40 = vpop.xlane.xlu0 %39
  %v41 = vsel %vm31, %v20, 0.0
  %42 = vadd.xlane.f32.xlu0 %v41
  %v43 = vpop.xlane.xlu0 %42
  %v44 = vadd.f32 %v34, 1.0
  %v45 = vadd.f32 %v37, 1.0
  %v46 = vadd.f32 %v40, 1.0
  %v47 = vadd.f32 %v43, 1.0
  %v48 = vrsqrt.pop %v44
  %v49 = vrsqrt.pop %v45
  %v50 = vrsqrt.pop %v46
  %v51 = vrsqrt.pop %v47
  %v52 = vmul.f32 %v48, %v48
  %v53 = vmul.f32 %v49, %v49
  %v54 = vmul.f32 %v50, %v50
  %v55 = vmul.f32 %v51, %v51
  %v56 = vmul.f32 %v17, %v48
  %v57 = vmul.f32 %v18, %v49
  %v58 = vmul.f32 %v19, %v50
  %v59 = vmul.f32 %v20, %v51
  %v60 = vlaneseq
  %v61 = vshrl.u32 %v60, 7
  %v62 = vadd.s32 %v61, 8
  %v63 = vadd.s32 %v61, 16
  %v64 = vadd.s32 %v61, 24
  %vm65 = vcmp.ge.s32.totalorder %v61, 0
  %vm66 = vcmp.ge.s32.totalorder %v62, 0
  %vm67 = vcmp.ge.s32.totalorder %v63, 0
  %vm68 = vcmp.ge.s32.totalorder %v64, 0
  %vm69 = vcmp.lt.s32.totalorder %v61, 8
  %vm70 = vcmp.lt.s32.totalorder %v62, 8
  %vm71 = vcmp.lt.s32.totalorder %v63, 8
  %vm72 = vcmp.lt.s32.totalorder %v64, 8
  %vm73 = vmand %vm65, %vm69
  %vm74 = vmand %vm66, %vm70
  %vm75 = vmand %vm67, %vm71
  %vm76 = vmand %vm68, %vm72
  %v77 = vsel %vm73, %v56, 0.0
  %v78 = vsel %vm74, %v57, 0.0
  %v79 = vsel %vm75, %v58, 0.0
  %v80 = vsel %vm76, %v59, 0.0
  %vm81 = vcmp.ge.s32.totalorder %v61, 8
  %vm82 = vcmp.ge.s32.totalorder %v62, 8
  %vm83 = vcmp.ge.s32.totalorder %v63, 8
  %vm84 = vcmp.ge.s32.totalorder %v64, 8
  %vm85 = vcmp.lt.s32.totalorder %v61, 16
  %vm86 = vcmp.lt.s32.totalorder %v62, 16
  %vm87 = vcmp.lt.s32.totalorder %v63, 16
  %vm88 = vcmp.lt.s32.totalorder %v64, 16
  %vm89 = vmand %vm81, %vm85
  %vm90 = vmand %vm82, %vm86
  %vm91 = vmand %vm83, %vm87
  %vm92 = vmand %vm84, %vm88
  %v93 = vsel %vm89, %v56, 0.0
  %v94 = vsel %vm90, %v57, 0.0
  %v95 = vsel %vm91, %v58, 0.0
  %v96 = vsel %vm92, %v59, 0.0
  %vm97 = vcmp.ge.s32.totalorder %v61, 16
  %vm98 = vcmp.ge.s32.totalorder %v62, 16
  %vm99 = vcmp.ge.s32.totalorder %v63, 16
  %vm100 = vcmp.ge.s32.totalorder %v64, 16
  %vm101 = vcmp.lt.s32.totalorder %v61, 24
  %vm102 = vcmp.lt.s32.totalorder %v62, 24
  %vm103 = vcmp.lt.s32.totalorder %v63, 24
  %vm104 = vcmp.lt.s32.totalorder %v64, 24
  %vm105 = vmand %vm97, %vm101
  %vm106 = vmand %vm98, %vm102
  %vm107 = vmand %vm99, %vm103
  %vm108 = vmand %vm100, %vm104
  %v109 = vsel %vm105, %v56, 0.0
  %v110 = vsel %vm106, %v57, 0.0
  %v111 = vsel %vm107, %v58, 0.0
  %v112 = vsel %vm108, %v59, 0.0
  %vm113 = vcmp.ge.s32.totalorder %v61, 24
  %vm114 = vcmp.ge.s32.totalorder %v62, 24
  %vm115 = vcmp.ge.s32.totalorder %v63, 24
  %vm116 = vcmp.ge.s32.totalorder %v64, 24
  %vm117 = vcmp.lt.s32.totalorder %v61, 32
  %vm118 = vcmp.lt.s32.totalorder %v62, 32
  %vm119 = vcmp.lt.s32.totalorder %v63, 32
  %vm120 = vcmp.lt.s32.totalorder %v64, 32
  %vm121 = vmand %vm113, %vm117
  %vm122 = vmand %vm114, %vm118
  %vm123 = vmand %vm115, %vm119
  %vm124 = vmand %vm116, %vm120
  %v125 = vsel %vm121, %v56, 0.0
  %v126 = vsel %vm122, %v57, 0.0
  %v127 = vsel %vm123, %v58, 0.0
  %v128 = vsel %vm124, %v59, 0.0
  %133 = vrot.lane.b32.xlu0 %v93, 8
  %v134 = vpop.permute.xlu0 %133
  %135 = vrot.lane.b32.xlu0 %v94, 8
  %v136 = vpop.permute.xlu0 %135
  %137 = vrot.lane.b32.xlu0 %v95, 8
  %v138 = vpop.permute.xlu0 %137
  %139 = vrot.lane.b32.xlu0 %v96, 8
  %v140 = vpop.permute.xlu0 %139
  %149 = vrot.lane.b32.xlu0 %v109, 16
  %v150 = vpop.permute.xlu0 %149
  %151 = vrot.lane.b32.xlu0 %v110, 16
  %v152 = vpop.permute.xlu0 %151
  %153 = vrot.lane.b32.xlu0 %v111, 16
  %v154 = vpop.permute.xlu0 %153
  %155 = vrot.lane.b32.xlu0 %v112, 16
  %v156 = vpop.permute.xlu0 %155
  %165 = vrot.lane.b32.xlu0 %v125, 24
  %v166 = vpop.permute.xlu0 %165
  %167 = vrot.lane.b32.xlu0 %v126, 24
  %v168 = vpop.permute.xlu0 %167
  %169 = vrot.lane.b32.xlu0 %v127, 24
  %v170 = vpop.permute.xlu0 %169
  %171 = vrot.lane.b32.xlu0 %v128, 24
  %v172 = vpop.permute.xlu0 %171
  %v177 = vsel %vm31, %v77, %v134
  %v178 = vsel %vm31, %v78, %v136
  %v179 = vsel %vm31, %v79, %v138
  %v180 = vsel %vm31, %v80, %v140
  %vm181 = vcmask 130048
  %v182 = vsel %vm181, %v177, %v150
  %v183 = vsel %vm181, %v178, %v152
  %v184 = vsel %vm181, %v179, %v154
  %v185 = vsel %vm181, %v180, %v156
  %vm186 = vcmask 195584
  %v187 = vsel %vm186, %v182, %v166
  %v188 = vsel %vm186, %v183, %v168
  %v189 = vsel %vm186, %v184, %v170
  %v190 = vsel %vm186, %v185, %v172
  %v191 = vmul.f32 %v48, %v21
  %v192 = vmul.f32 %v49, %v22
  %v193 = vmul.f32 %v50, %v23
  %v194 = vmul.f32 %v51, %v24
  %v195 = vmul.f32 %v52, %v21
  %v196 = vmul.f32 %v53, %v22
  %v197 = vmul.f32 %v54, %v23
  %v198 = vmul.f32 %v55, %v24
  %vm199 = vcmask 261120
  %v201 = vsel %vm199, %v187, 0
  %v204 = vsel %vm199, %v188, 0
  %v207 = vsel %vm199, %v189, 0
  %v210 = vsel %vm199, %v190, 0
  %212 = vmatprep.subr.mxu0 0.0
  %213 = vmatpush1.msra.mxu0 %v191
  %214 = vmatprep.subr.mxu0 0.0
  %215 = vmatpush1.msra.mxu0 %v192
  %216 = vmatprep.subr.mxu0 0.0
  %217 = vmatpush1.msra.mxu0 %v193
  %218 = vmatprep.subr.mxu0 0.0
  %219 = vmatpush1.msra.mxu0 %v194
  %220 = vmatprep.subr.mxu0 0.0
  %221 = vmatpush1.msra.mxu0 0.0
  %222 = vmatprep.subr.mxu0 0.0
  %223 = vmatpush1.msra.mxu0 0.0
  %224 = vmatprep.subr.mxu0 0.0
  %225 = vmatpush1.msra.mxu0 0.0
  %226 = vmatprep.subr.mxu0 0.0
  %227 = vmatpush1.msra.mxu0 0.0
  %228 = vmatprep.subr.mxu0 0.0
  %229 = vmatpush1.msra.mxu0 0.0
  %230 = vmatprep.subr.mxu0 0.0
  %231 = vmatpush1.msra.mxu0 0.0
  %232 = vmatprep.subr.mxu0 0.0
  %233 = vmatpush1.msra.mxu0 0.0
  %234 = vmatprep.subr.mxu0 0.0
  %235 = vmatpush1.msra.mxu0 0.0
  %236 = vmatprep.subr.mxu0 0.0
  %237 = vmatpush1.msra.mxu0 0.0
  %238 = vmatprep.subr.mxu0 0.0
  %239 = vmatpush1.msra.mxu0 0.0
  %240 = vmatprep.subr.mxu0 0.0
  %241 = vmatpush1.msra.mxu0 0.0
  %242 = vmatprep.subr.mxu0 0.0
  %243 = vmatpush1.msra.mxu0 0.0
  %244 = vmatprep.subr.mxu0 0.0
  %245 = vmatpush1.msra.mxu0 0.0
  %246 = vmatprep.subr.mxu0 0.0
  %247 = vmatpush1.msra.mxu0 0.0
  %248 = vmatprep.subr.mxu0 0.0
  %249 = vmatpush1.msra.mxu0 0.0
  %250 = vmatprep.subr.mxu0 0.0
  %251 = vmatpush1.msra.mxu0 0.0
  %252 = vmatprep.subr.mxu0 0.0
  %253 = vmatpush1.msra.mxu0 0.0
  %254 = vmatprep.subr.mxu0 0.0
  %255 = vmatpush1.msra.mxu0 0.0
  %256 = vmatprep.subr.mxu0 0.0
  %257 = vmatpush1.msra.mxu0 0.0
  %258 = vmatprep.subr.mxu0 0.0
  %259 = vmatpush1.msra.mxu0 0.0
  %260 = vmatprep.subr.mxu0 0.0
  %261 = vmatpush1.msra.mxu0 0.0
  %262 = vmatprep.subr.mxu0 0.0
  %263 = vmatpush1.msra.mxu0 0.0
  %264 = vmatprep.subr.mxu0 0.0
  %265 = vmatpush1.msra.mxu0 0.0
  %266 = vmatprep.subr.mxu0 0.0
  %267 = vmatpush1.msra.mxu0 0.0
  %268 = vmatprep.subr.mxu0 0.0
  %269 = vmatpush1.msra.mxu0 0.0
  %270 = vmatprep.subr.mxu0 0.0
  %271 = vmatpush1.msra.mxu0 0.0
  %272 = vmatprep.subr.mxu0 0.0
  %273 = vmatpush1.msra.mxu0 0.0
  %274 = vmatprep.subr.mxu0 0.0
  %275 = vmatpush1.msra.mxu0 0.0
  %276 = vmatprep.mubr.f32.mxu0 0.0
  %277 = vmatmul.mubr.f32.gmra.mrb[0].mxu0 %v201
  %v278 = vpop.f32.mrb[0].mxu0
  %v279 = vadd.f32 %v195, %v278
  %v280 = vpop.f32.mrb[0].mxu0
  %281 = vmatprep.mubr.f32.mxu0 0.0
  %282 = vmatmul.mubr.f32.gmra.mrb[0].mxu0 %v204
  %v283 = vpop.f32.mrb[0].mxu0
  %v284 = vadd.f32 %v196, %v283
  %v285 = vpop.f32.mrb[0].mxu0
  %286 = vmatprep.mubr.f32.mxu0 0.0
  %287 = vmatmul.mubr.f32.gmra.mrb[0].mxu0 %v207
  %v288 = vpop.f32.mrb[0].mxu0
  %v289 = vadd.f32 %v197, %v288
  %v290 = vpop.f32.mrb[0].mxu0
  %291 = vmatprep.mubr.f32.mxu0 0.0
  %292 = vmatmul.mubr.f32.gmra.mrb[0].mxu0 %v210
  %v293 = vpop.f32.mrb[0].mxu0
  %v294 = vadd.f32 %v198, %v293
  %v295 = vpop.f32.mrb[0].mxu0
  %296 = vdwg.mxu0
  %v298 = vsel %vm181, %v279, 0
  %v301 = vsel %vm181, %v284, 0
  %v304 = vsel %vm181, %v289, 0
  %v307 = vsel %vm181, %v294, 0
  %309 = vmatprep.subr.mxu0 0.0
  %310 = vmatpush1.msra.mxu0 %v25
  %311 = vmatprep.subr.mxu0 0.0
  %312 = vmatpush1.msra.mxu0 %v26
  %313 = vmatprep.subr.mxu0 0.0
  %314 = vmatpush1.msra.mxu0 0.0
  %315 = vmatprep.subr.mxu0 0.0
  %316 = vmatpush1.msra.mxu0 0.0
  %317 = vmatprep.subr.mxu0 0.0
  %318 = vmatpush1.msra.mxu0 0.0
  %319 = vmatprep.subr.mxu0 0.0
  %320 = vmatpush1.msra.mxu0 0.0
  %321 = vmatprep.subr.mxu0 0.0
  %322 = vmatpush1.msra.mxu0 0.0
  %323 = vmatprep.subr.mxu0 0.0
  %324 = vmatpush1.msra.mxu0 0.0
  %325 = vmatprep.subr.mxu0 0.0
  %326 = vmatpush1.msra.mxu0 0.0
  %327 = vmatprep.subr.mxu0 0.0
  %328 = vmatpush1.msra.mxu0 0.0
  %329 = vmatprep.subr.mxu0 0.0
  %330 = vmatpush1.msra.mxu0 0.0
  %331 = vmatprep.subr.mxu0 0.0
  %332 = vmatpush1.msra.mxu0 0.0
  %333 = vmatprep.subr.mxu0 0.0
  %334 = vmatpush1.msra.mxu0 0.0
  %335 = vmatprep.subr.mxu0 0.0
  %336 = vmatpush1.msra.mxu0 0.0
  %337 = vmatprep.subr.mxu0 0.0
  %338 = vmatpush1.msra.mxu0 0.0
  %339 = vmatprep.subr.mxu0 0.0
  %340 = vmatpush1.msra.mxu0 0.0
  %341 = vmatprep.subr.mxu0 0.0
  %342 = vmatpush1.msra.mxu0 0.0
  %343 = vmatprep.subr.mxu0 0.0
  %344 = vmatpush1.msra.mxu0 0.0
  %345 = vmatprep.subr.mxu0 0.0
  %346 = vmatpush1.msra.mxu0 0.0
  %347 = vmatprep.subr.mxu0 0.0
  %348 = vmatpush1.msra.mxu0 0.0
  %349 = vmatprep.subr.mxu0 0.0
  %350 = vmatpush1.msra.mxu0 0.0
  %351 = vmatprep.subr.mxu0 0.0
  %352 = vmatpush1.msra.mxu0 0.0
  %353 = vmatprep.subr.mxu0 0.0
  %354 = vmatpush1.msra.mxu0 0.0
  %355 = vmatprep.subr.mxu0 0.0
  %356 = vmatpush1.msra.mxu0 0.0
  %357 = vmatprep.subr.mxu0 0.0
  %358 = vmatpush1.msra.mxu0 0.0
  %359 = vmatprep.subr.mxu0 0.0
  %360 = vmatpush1.msra.mxu0 0.0
  %361 = vmatprep.subr.mxu0 0.0
  %362 = vmatpush1.msra.mxu0 0.0
  %363 = vmatprep.subr.mxu0 0.0
  %364 = vmatpush1.msra.mxu0 0.0
  %365 = vmatprep.subr.mxu0 0.0
  %366 = vmatpush1.msra.mxu0 0.0
  %367 = vmatprep.subr.mxu0 0.0
  %368 = vmatpush1.msra.mxu0 0.0
  %369 = vmatprep.subr.mxu0 0.0
  %370 = vmatpush1.msra.mxu0 0.0
  %371 = vmatprep.subr.mxu0 0.0
  %372 = vmatpush1.msra.mxu0 0.0
  %373 = vmatprep.mubr.f32.mxu0 0.0
  %374 = vmatmul.mubr.f32.gmra.mrb[0].mxu0 %v298
  %v375 = vpop.f32.mrb[0].mxu0
  %v376 = vadd.f32 0.0, %v375
  %v377 = vpop.f32.mrb[0].mxu0
  %378 = vmatprep.mubr.f32.mxu0 0.0
  %379 = vmatmul.mubr.f32.gmra.mrb[0].mxu0 %v301
  %v380 = vpop.f32.mrb[0].mxu0
  %v381 = vadd.f32 0.0, %v380
  %v382 = vpop.f32.mrb[0].mxu0
  %383 = vmatprep.mubr.f32.mxu0 0.0
  %384 = vmatmul.mubr.f32.gmra.mrb[0].mxu0 %v304
  %v385 = vpop.f32.mrb[0].mxu0
  %v386 = vadd.f32 0.0, %v385
  %v387 = vpop.f32.mrb[0].mxu0
  %388 = vmatprep.mubr.f32.mxu0 0.0
  %389 = vmatmul.mubr.f32.gmra.mrb[0].mxu0 %v307
  %v390 = vpop.f32.mrb[0].mxu0
  %v391 = vadd.f32 0.0, %v390
  %v392 = vpop.f32.mrb[0].mxu0
  %393 = vdwg.mxu0
  %v394 = vmax.f32 %v376, 0.0
  %v395 = vmax.f32 %v381, 0.0
  %v396 = vmax.f32 %v386, 0.0
  %v397 = vmax.f32 %v391, 0.0
  %v399 = vsel %vm199, %v394, 0
  %v402 = vsel %vm199, %v395, 0
  %v405 = vsel %vm199, %v396, 0
  %v408 = vsel %vm199, %v397, 0
  %410 = vmatprep.subr.mxu0 0.0
  %411 = vmatpush1.msra.mxu0 %v27
  %412 = vmatprep.subr.mxu0 0.0
  %413 = vmatpush1.msra.mxu0 %v28
  %414 = vmatprep.subr.mxu0 0.0
  %415 = vmatpush1.msra.mxu0 %v29
  %416 = vmatprep.subr.mxu0 0.0
  %417 = vmatpush1.msra.mxu0 %v30
  %418 = vmatprep.subr.mxu0 0.0
  %419 = vmatpush1.msra.mxu0 0.0
  %420 = vmatprep.subr.mxu0 0.0
  %421 = vmatpush1.msra.mxu0 0.0
  %422 = vmatprep.subr.mxu0 0.0
  %423 = vmatpush1.msra.mxu0 0.0
  %424 = vmatprep.subr.mxu0 0.0
  %425 = vmatpush1.msra.mxu0 0.0
  %426 = vmatprep.subr.mxu0 0.0
  %427 = vmatpush1.msra.mxu0 0.0
  %428 = vmatprep.subr.mxu0 0.0
  %429 = vmatpush1.msra.mxu0 0.0
  %430 = vmatprep.subr.mxu0 0.0
  %431 = vmatpush1.msra.mxu0 0.0
  %432 = vmatprep.subr.mxu0 0.0
  %433 = vmatpush1.msra.mxu0 0.0
  %434 = vmatprep.subr.mxu0 0.0
  %435 = vmatpush1.msra.mxu0 0.0
  %436 = vmatprep.subr.mxu0 0.0
  %437 = vmatpush1.msra.mxu0 0.0
  %438 = vmatprep.subr.mxu0 0.0
  %439 = vmatpush1.msra.mxu0 0.0
  %440 = vmatprep.subr.mxu0 0.0
  %441 = vmatpush1.msra.mxu0 0.0
  %442 = vmatprep.subr.mxu0 0.0
  %443 = vmatpush1.msra.mxu0 0.0
  %444 = vmatprep.subr.mxu0 0.0
  %445 = vmatpush1.msra.mxu0 0.0
  %446 = vmatprep.subr.mxu0 0.0
  %447 = vmatpush1.msra.mxu0 0.0
  %448 = vmatprep.subr.mxu0 0.0
  %449 = vmatpush1.msra.mxu0 0.0
  %450 = vmatprep.subr.mxu0 0.0
  %451 = vmatpush1.msra.mxu0 0.0
  %452 = vmatprep.subr.mxu0 0.0
  %453 = vmatpush1.msra.mxu0 0.0
  %454 = vmatprep.subr.mxu0 0.0
  %455 = vmatpush1.msra.mxu0 0.0
  %456 = vmatprep.subr.mxu0 0.0
  %457 = vmatpush1.msra.mxu0 0.0
  %458 = vmatprep.subr.mxu0 0.0
  %459 = vmatpush1.msra.mxu0 0.0
  %460 = vmatprep.subr.mxu0 0.0
  %461 = vmatpush1.msra.mxu0 0.0
  %462 = vmatprep.subr.mxu0 0.0
  %463 = vmatpush1.msra.mxu0 0.0
  %464 = vmatprep.subr.mxu0 0.0
  %465 = vmatpush1.msra.mxu0 0.0
  %466 = vmatprep.subr.mxu0 0.0
  %467 = vmatpush1.msra.mxu0 0.0
  %468 = vmatprep.subr.mxu0 0.0
  %469 = vmatpush1.msra.mxu0 0.0
  %470 = vmatprep.subr.mxu0 0.0
  %471 = vmatpush1.msra.mxu0 0.0
  %472 = vmatprep.subr.mxu0 0.0
  %473 = vmatpush1.msra.mxu0 0.0
  %474 = vmatprep.mubr.f32.mxu0 0.0
  %475 = vmatmul.mubr.f32.gmra.mrb[0].mxu0 %v399
  %v476 = vpop.f32.mrb[0].mxu0
  %v477 = vadd.f32 0.0, %v476
  %v478 = vpop.f32.mrb[0].mxu0
  %479 = vmatprep.mubr.f32.mxu0 0.0
  %480 = vmatmul.mubr.f32.gmra.mrb[0].mxu0 %v402
  %v481 = vpop.f32.mrb[0].mxu0
  %v482 = vadd.f32 0.0, %v481
  %v483 = vpop.f32.mrb[0].mxu0
  %484 = vmatprep.mubr.f32.mxu0 0.0
  %485 = vmatmul.mubr.f32.gmra.mrb[0].mxu0 %v405
  %v486 = vpop.f32.mrb[0].mxu0
  %v487 = vadd.f32 0.0, %v486
  %v488 = vpop.f32.mrb[0].mxu0
  %489 = vmatprep.mubr.f32.mxu0 0.0
  %490 = vmatmul.mubr.f32.gmra.mrb[0].mxu0 %v408
  %v491 = vpop.f32.mrb[0].mxu0
  %v492 = vadd.f32 0.0, %v491
  %v493 = vpop.f32.mrb[0].mxu0
  %494 = vdwg.mxu0
  %v495 = vmul.f32 %v48, %v477
  %v496 = vmul.f32 %v49, %v482
  %v497 = vmul.f32 %v50, %v487
  %v498 = vmul.f32 %v51, %v492
  %v499 = vmul.f32 %v52, %v477
  %v500 = vmul.f32 %v53, %v482
  %v501 = vmul.f32 %v54, %v487
  %v502 = vmul.f32 %v55, %v492
  %503 = vmatprep.subr.mxu0 0.0
  %504 = vmatpush1.msra.mxu0 %v495
  %505 = vmatprep.subr.mxu0 0.0
  %506 = vmatpush1.msra.mxu0 %v496
  %507 = vmatprep.subr.mxu0 0.0
  %508 = vmatpush1.msra.mxu0 %v497
  %509 = vmatprep.subr.mxu0 0.0
  %510 = vmatpush1.msra.mxu0 %v498
  %511 = vmatprep.subr.mxu0 0.0
  %512 = vmatpush1.msra.mxu0 0.0
  %513 = vmatprep.subr.mxu0 0.0
  %514 = vmatpush1.msra.mxu0 0.0
  %515 = vmatprep.subr.mxu0 0.0
  %516 = vmatpush1.msra.mxu0 0.0
  %517 = vmatprep.subr.mxu0 0.0
  %518 = vmatpush1.msra.mxu0 0.0
  %519 = vmatprep.subr.mxu0 0.0
  %520 = vmatpush1.msra.mxu0 0.0
  %521 = vmatprep.subr.mxu0 0.0
  %522 = vmatpush1.msra.mxu0 0.0
  %523 = vmatprep.subr.mxu0 0.0
  %524 = vmatpush1.msra.mxu0 0.0
  %525 = vmatprep.subr.mxu0 0.0
  %526 = vmatpush1.msra.mxu0 0.0
  %527 = vmatprep.subr.mxu0 0.0
  %528 = vmatpush1.msra.mxu0 0.0
  %529 = vmatprep.subr.mxu0 0.0
  %530 = vmatpush1.msra.mxu0 0.0
  %531 = vmatprep.subr.mxu0 0.0
  %532 = vmatpush1.msra.mxu0 0.0
  %533 = vmatprep.subr.mxu0 0.0
  %534 = vmatpush1.msra.mxu0 0.0
  %535 = vmatprep.subr.mxu0 0.0
  %536 = vmatpush1.msra.mxu0 0.0
  %537 = vmatprep.subr.mxu0 0.0
  %538 = vmatpush1.msra.mxu0 0.0
  %539 = vmatprep.subr.mxu0 0.0
  %540 = vmatpush1.msra.mxu0 0.0
  %541 = vmatprep.subr.mxu0 0.0
  %542 = vmatpush1.msra.mxu0 0.0
  %543 = vmatprep.subr.mxu0 0.0
  %544 = vmatpush1.msra.mxu0 0.0
  %545 = vmatprep.subr.mxu0 0.0
  %546 = vmatpush1.msra.mxu0 0.0
  %547 = vmatprep.subr.mxu0 0.0
  %548 = vmatpush1.msra.mxu0 0.0
  %549 = vmatprep.subr.mxu0 0.0
  %550 = vmatpush1.msra.mxu0 0.0
  %551 = vmatprep.subr.mxu0 0.0
  %552 = vmatpush1.msra.mxu0 0.0
  %553 = vmatprep.subr.mxu0 0.0
  %554 = vmatpush1.msra.mxu0 0.0
  %555 = vmatprep.subr.mxu0 0.0
  %556 = vmatpush1.msra.mxu0 0.0
  %557 = vmatprep.subr.mxu0 0.0
  %558 = vmatpush1.msra.mxu0 0.0
  %559 = vmatprep.subr.mxu0 0.0
  %560 = vmatpush1.msra.mxu0 0.0
  %561 = vmatprep.subr.mxu0 0.0
  %562 = vmatpush1.msra.mxu0 0.0
  %563 = vmatprep.subr.mxu0 0.0
  %564 = vmatpush1.msra.mxu0 0.0
  %565 = vmatprep.subr.mxu0 0.0
  %566 = vmatpush1.msra.mxu0 0.0
  %567 = vmatprep.mubr.f32.mxu0 0.0
  %568 = vmatmul.mubr.f32.gmra.mrb[0].mxu0 %v201
  %v569 = vpop.f32.mrb[0].mxu0
  %v570 = vadd.f32 %v499, %v569
  %v571 = vpop.f32.mrb[0].mxu0
  %572 = vmatprep.mubr.f32.mxu0 0.0
  %573 = vmatmul.mubr.f32.gmra.mrb[0].mxu0 %v204
  %v574 = vpop.f32.mrb[0].mxu0
  %v575 = vadd.f32 %v500, %v574
  %v576 = vpop.f32.mrb[0].mxu0
  %577 = vmatprep.mubr.f32.mxu0 0.0
  %578 = vmatmul.mubr.f32.gmra.mrb[0].mxu0 %v207
  %v579 = vpop.f32.mrb[0].mxu0
  %v580 = vadd.f32 %v501, %v579
  %v581 = vpop.f32.mrb[0].mxu0
  %582 = vmatprep.mubr.f32.mxu0 0.0
  %583 = vmatmul.mubr.f32.gmra.mrb[0].mxu0 %v210
  %v584 = vpop.f32.mrb[0].mxu0
  %v585 = vadd.f32 %v502, %v584
  %v586 = vpop.f32.mrb[0].mxu0
  %587 = vdwg.mxu0
  %v588 = vsel %vm31, %v570, -inf
  %589 = vmax.xlane.f32.xlu0 %v588
  %v590 = vpop.xlane.xlu0 %589
  %v591 = vsel %vm31, %v575, -inf
  %592 = vmax.xlane.f32.xlu0 %v591
  %v593 = vpop.xlane.xlu0 %592
  %v594 = vsel %vm31, %v580, -inf
  %595 = vmax.xlane.f32.xlu0 %v594
  %v596 = vpop.xlane.xlu0 %595
  %v597 = vsel %vm31, %v585, -inf
  %598 = vmax.xlane.f32.xlu0 %v597
  %v599 = vpop.xlane.xlu0 %598
  %v600 = vsub.f32 %v570, %v590
  %v601 = vsub.f32 %v575, %v593
  %v602 = vsub.f32 %v580, %v596
  %v603 = vsub.f32 %v585, %v599
  %v604 = vmul.f32 %v600, 1.442695
  %v605 = vpow.pop %v604
  %v606 = vmul.f32 %v601, 1.442695
  %v607 = vpow.pop %v606
  %v608 = vmul.f32 %v602, 1.442695
  %v609 = vpow.pop %v608
  %v610 = vmul.f32 %v603, 1.442695
  %v611 = vpow.pop %v610
  %v612 = vsel %vm31, %v605, 0.0
  %613 = vadd.xlane.f32.xlu0 %v612
  %v614 = vpop.xlane.xlu0 %613
  %v615 = vsel %vm31, %v607, 0.0
  %616 = vadd.xlane.f32.xlu0 %v615
  %v617 = vpop.xlane.xlu0 %616
  %v618 = vsel %vm31, %v609, 0.0
  %619 = vadd.xlane.f32.xlu0 %v618
  %v620 = vpop.xlane.xlu0 %619
  %v621 = vsel %vm31, %v611, 0.0
  %622 = vadd.xlane.f32.xlu0 %v621
  %v623 = vpop.xlane.xlu0 %622
  %v624 = vrcp.pop %v614
  %v625 = vmul.f32 %v605, %v624
  %v626 = vrcp.pop %v617
  %v627 = vmul.f32 %v607, %v626
  %v628 = vrcp.pop %v620
  %v629 = vmul.f32 %v609, %v628
  %v630 = vrcp.pop %v623
  %v631 = vmul.f32 %v611, %v630
  %632 = vst.msk [vmem:[%s4] sm:$0xff] %vm31, %v625
  %633 = vst.msk [vmem:[%s4 + $0x8] sm:$0xff] %vm31, %v627
  %634 = vst.msk [vmem:[%s4 + $0x10] sm:$0xff] %vm31, %v629
  %635 = vst.msk [vmem:[%s4 + $0x18] sm:$0xff] %vm31, %v631
  // Predicated region
  $region18: #{tpu_custom_call.1} parent=0 // pred_check
    _
  $region19: #{tpu_custom_call.1} parent=0 // pred_check_branch
    %637 = sbr.rel (0) target = $region21
  $region20: #{tpu_custom_call.1} parent=0 // pred_region
    _
  $region21: #{tpu_custom_call.1} parent=0 // pred_fallthru
    _
  // Predicated region
  $region22: #{tpu_custom_call.1} parent=0 // pred_check
    _
  $region23: #{tpu_custom_call.1} parent=0 // pred_check_branch
    %639 = sbr.rel (0) target = $region25
  $region24: #{tpu_custom_call.1} parent=0 // pred_region
    _
  $region25: #{tpu_custom_call.1} parent=0 // pred_fallthru
    _

</llo_original>
